<compile_context>
chip_gen: v5e
topology: v5e:2x2
jax: 0.10.0
libtpu: 0.0.40
codegen_flags: <defaults>
</compile_context>

<pallas_src>
import functools

import jax
import jax.numpy as jnp
from jax.experimental import pallas as pl
from jax.experimental.pallas import tpu as pltpu


NEG_PAD = -1e30  # finite "minus infinity" for padded logit columns (avoids inf/NaN math)


def _round_up(x, m):
    return ((x + m - 1) // m) * m


def ffnn_kernel(x_ref, w1_ref, b1_ref, w2_ref, b2_ref, o_ref):
    # Hidden layer: x @ W1^T + b1, ReLU.  bf16 operands on the MXU, f32 accumulation.
    x = x_ref[...]                                              # (TB, D) bf16
    h = jnp.dot(x, w1_ref[...], preferred_element_type=jnp.float32) + b1_ref[...]
    h = jnp.maximum(h, 0.0)                                     # (TB, Hp) f32

    # Output layer: h @ W2^T + b2 over the 128-lane-padded logits (padded bias = -1e30).
    z = (jnp.dot(h.astype(w2_ref.dtype), w2_ref[...],
                 preferred_element_type=jnp.float32)
         + b2_ref[...])                                         # (TB, Op) f32

    # Numerically stable LogSoftmax over the feature axis.  Padded columns contribute
    # exp(-1e30 - m) == 0 to the sum, so the real columns are unaffected.
    m = jnp.max(z, axis=-1, keepdims=True)
    lse = m + jnp.log(jnp.sum(jnp.exp(z - m), axis=-1, keepdims=True))
    logp = z - lse

    # Store only the real output columns (narrow, un-padded writeback).
    o_dim = o_ref.shape[-1]
    o_ref[...] = logp[:, :o_dim].astype(o_ref.dtype)


def prepare_ffnn_params(w1_t, b1, w2_t, b2):
    """One-time weight preparation (hoisted out of the per-call path).

    w1_t: [D, H] (= W1.T), b1: [1, H], w2_t: [H, O] (= W2.T), b2: [1, O].
    Returns (w1_p[D,Hp] bf16, b1_p[1,Hp] f32, w2_p[Hp,Op] bf16, b2_p[1,Op] f32, O).
    """
    D, H = w1_t.shape
    O = w2_t.shape[1]
    Hp = _round_up(H, 128)   # lane-dense hidden dim (MXU / VPU fill)
    Op = _round_up(O, 128)   # lane-dense logits for the in-kernel softmax

    w1_p = jnp.zeros((D, Hp), jnp.bfloat16).at[:, :H].set(w1_t.astype(jnp.bfloat16))
    b1_p = jnp.zeros((1, Hp), jnp.float32).at[:, :H].set(
        jnp.reshape(b1, (1, H)).astype(jnp.float32))
    w2_p = jnp.zeros((Hp, Op), jnp.bfloat16).at[:H, :O].set(w2_t.astype(jnp.bfloat16))
    b2_p = jnp.full((1, Op), NEG_PAD, jnp.float32).at[:, :O].set(
        jnp.reshape(b2, (1, O)).astype(jnp.float32))
    return w1_p, b1_p, w2_p, b2_p, O


@functools.partial(jax.jit, static_argnames=("out_dim", "block_b"))
def ffnn_forward(x, w1_p, b1_p, w2_p, b2_p, *, out_dim, block_b=4096):
    """x: [B, D] f32; prepared params from prepare_ffnn_params -> [B, out_dim] f32."""
    B, D = x.shape
    Hp = w1_p.shape[1]
    Op = w2_p.shape[1]
    O = out_dim

    # Tiny batch pad to a multiple of 16 (bf16 sublane packing); NOT a full-TB pad.
    B16 = _round_up(B, 16)
    TB = min(block_b, B16)
    if B16 >= 32:
        # Guarantee >= 2 grid steps so the "parallel" axis spans both v7x TensorCores.
        TB = min(TB, _round_up(pl.cdiv(B16, 2), 16))
    grid = (pl.cdiv(B16, TB),)

    x_bf = x.astype(jnp.bfloat16)
    if B16 != B:
        x_bf = jnp.zeros((B16, D), jnp.bfloat16).at[:B, :].set(x_bf)

    out = pl.pallas_call(
        ffnn_kernel,
        out_shape=jax.ShapeDtypeStruct((B16, O), jnp.float32),
        grid=grid,
        in_specs=[
            pl.BlockSpec((TB, D), lambda i: (i, 0)),     # x: streamed over batch
            pl.BlockSpec((D, Hp), lambda i: (0, 0)),     # W1^T (H-padded): resident
            pl.BlockSpec((1, Hp), lambda i: (0, 0)),     # b1   (H-padded): resident
            pl.BlockSpec((Hp, Op), lambda i: (0, 0)),    # W2^T (padded):   resident
            pl.BlockSpec((1, Op), lambda i: (0, 0)),     # b2   (padded):   resident
        ],
        out_specs=pl.BlockSpec((TB, O), lambda i: (i, 0)),   # narrow f32 writeback
        compiler_params=pltpu.CompilerParams(
            dimension_semantics=("parallel",),
        ),
    )(x_bf, w1_p, b1_p, w2_p, b2_p)

    return out[:B] if B16 != B else out


def reference_forward_bf16(x, w1_t, b1, w2_t, b2):
    """Reference that mirrors the kernel's bf16-operand / f32-accumulate path."""
    xb = x.astype(jnp.bfloat16)
    w1b = w1_t.astype(jnp.bfloat16)
    h = jnp.maximum(jnp.dot(xb, w1b, preferred_element_type=jnp.float32) + b1, 0.0)
    z = jnp.dot(h.astype(jnp.bfloat16), w2_t.astype(jnp.bfloat16),
                preferred_element_type=jnp.float32) + b2
    return jax.nn.log_softmax(z, axis=1)


def reference_forward_f32(x, w1_t, b1, w2_t, b2):
    h = jnp.maximum(x @ w1_t + b1, 0.0)
    z = h @ w2_t + b2
    return jax.nn.log_softmax(z, axis=1)


# TODO(synk): compute_Loss (NLLLoss) is a training-time helper, not part of forward();
# it is intentionally not implemented as a kernel.


if __name__ == "__main__":
    # Small shapes consistent with the module: batch=8, input_dim=32, h=32, output_dim=5
    B, D, H, O = 8, 32, 32, 5

    key = jax.random.PRNGKey(0)
    kx, kw1, kb1, kw2, kb2, kx2 = jax.random.split(key, 6)

    x = jax.random.normal(kx, (B, D), dtype=jnp.float32)

    # Deterministic parameter init (PyTorch nn.Linear-style uniform bounds).
    bound1 = 1.0 / (D ** 0.5)
    w1_t = jax.random.uniform(kw1, (D, H), jnp.float32, -bound1, bound1)   # W1.T
    b1 = jax.random.uniform(kb1, (1, H), jnp.float32, -bound1, bound1)

    bound2 = 1.0 / (H ** 0.5)
    w2_t = jax.random.uniform(kw2, (H, O), jnp.float32, -bound2, bound2)   # W2.T
    b2 = jax.random.uniform(kb2, (1, O), jnp.float32, -bound2, bound2)

    # One-time weight prep (hoisted out of the per-call path).
    w1_p, b1_p, w2_p, b2_p, out_dim = prepare_ffnn_params(w1_t, b1, w2_t, b2)

    out = ffnn_forward(x, w1_p, b1_p, w2_p, b2_p, out_dim=out_dim)
    out = jax.block_until_ready(out)
    assert out.shape == (B, O)

    # Exact-path check (same bf16 operands / f32 accumulation as the kernel).
    ref_bf16 = reference_forward_bf16(x, w1_t, b1, w2_t, b2)
    assert jnp.allclose(out, ref_bf16, atol=1e-4, rtol=1e-4), "mismatch vs bf16 reference"

    # Looser check against the pure-f32 PyTorch-equivalent forward.
    ref_f32 = reference_forward_f32(x, w1_t, b1, w2_t, b2)
    assert jnp.allclose(out, ref_f32, atol=5e-2, rtol=5e-2), "mismatch vs f32 reference"

    # Exercise the multi-step grid + partial trailing block path (B not a multiple of TB).
    B2 = 300
    x2 = jax.random.normal(kx2, (B2, D), dtype=jnp.float32)
    out2 = jax.block_until_ready(
        ffnn_forward(x2, w1_p, b1_p, w2_p, b2_p, out_dim=out_dim))
    assert out2.shape == (B2, O)
    ref2_bf16 = reference_forward_bf16(x2, w1_t, b1, w2_t, b2)
    assert jnp.allclose(out2, ref2_bf16, atol=1e-4, rtol=1e-4), "mismatch (large B) vs bf16 reference"
    ref2_f32 = reference_forward_f32(x2, w1_t, b1, w2_t, b2)
    assert jnp.allclose(out2, ref2_f32, atol=1e-1, rtol=1e-1), "mismatch (large B) vs f32 reference"

    print("KERNEL_OK")
</pallas_src>

<mosaic_0001>
module attributes {stable_mosaic.version = 11 : i64} {
  func.func @ffnn_kernel(%arg0: i32, %arg1: memref<16x32xbf16, #tpu.memory_space<vmem>>, %arg2: memref<32x128xbf16, #tpu.memory_space<vmem>>, %arg3: memref<1x128xf32, #tpu.memory_space<vmem>>, %arg4: memref<128x128xbf16, #tpu.memory_space<vmem>>, %arg5: memref<1x128xf32, #tpu.memory_space<vmem>>, %arg6: memref<16x5xf32, #tpu.memory_space<vmem>>) attributes {dimension_semantics = [#tpu.dimension_semantics<parallel>], iteration_bounds = array<i64: 1>, scalar_prefetch = 0 : i64, scratch_operands = 0 : i64, tpu.core_type = #tpu.core_type<tc>, window_params = [{transform_indices = @transform_0, window_bounds = array<i64: 16, 32>}, {pipeline_mode = #tpu.pipeline_mode<synchronous>, transform_indices = @transform_1, window_bounds = array<i64: 32, 128>}, {pipeline_mode = #tpu.pipeline_mode<synchronous>, transform_indices = @transform_2, window_bounds = array<i64: 1, 128>}, {pipeline_mode = #tpu.pipeline_mode<synchronous>, transform_indices = @transform_3, window_bounds = array<i64: 128, 128>}, {pipeline_mode = #tpu.pipeline_mode<synchronous>, transform_indices = @transform_4, window_bounds = array<i64: 1, 128>}, {transform_indices = @transform_5, window_bounds = array<i64: 16, 5>}]} {
    %c0 = arith.constant 0 : index
    %c0_0 = arith.constant 0 : index
    %0 = vector.load %arg1[%c0, %c0_0] : memref<16x32xbf16, #tpu.memory_space<vmem>>, vector<16x32xbf16>
    %c0_1 = arith.constant 0 : index
    %c0_2 = arith.constant 0 : index
    %1 = vector.load %arg2[%c0_1, %c0_2] : memref<32x128xbf16, #tpu.memory_space<vmem>>, vector<32x128xbf16>
    %cst = arith.constant dense<0.000000e+00> : vector<16x128xf32>
    %2 = tpu.matmul %0, %1, %cst {dimension_numbers = #tpu.dot_dimension_numbers<[1], [0], [0], [1], [0, 0, 1, 1], [], []>} : vector<16x32xbf16>, vector<32x128xbf16>, vector<16x128xf32> -> vector<16x128xf32>
    %c0_3 = arith.constant 0 : index
    %c0_4 = arith.constant 0 : index
    %3 = vector.load %arg3[%c0_3, %c0_4] : memref<1x128xf32, #tpu.memory_space<vmem>>, vector<1x128xf32>
    %4 = vector.broadcast %3 : vector<1x128xf32> to vector<16x128xf32>
    %5 = arith.addf %2, %4 : vector<16x128xf32>
    %cst_5 = arith.constant 0.000000e+00 : f32
    %6 = vector.broadcast %cst_5 : f32 to vector<16x128xf32>
    %7 = arith.maximumf %5, %6 : vector<16x128xf32>
    %8 = arith.truncf %7 : vector<16x128xf32> to vector<16x128xbf16>
    %c0_6 = arith.constant 0 : index
    %c0_7 = arith.constant 0 : index
    %9 = vector.load %arg4[%c0_6, %c0_7] : memref<128x128xbf16, #tpu.memory_space<vmem>>, vector<128x128xbf16>
    %cst_8 = arith.constant dense<0.000000e+00> : vector<16x128xf32>
    %10 = tpu.matmul %8, %9, %cst_8 {dimension_numbers = #tpu.dot_dimension_numbers<[1], [0], [0], [1], [0, 0, 1, 1], [], []>} : vector<16x128xbf16>, vector<128x128xbf16>, vector<16x128xf32> -> vector<16x128xf32>
    %c0_9 = arith.constant 0 : index
    %c0_10 = arith.constant 0 : index
    %11 = vector.load %arg5[%c0_9, %c0_10] : memref<1x128xf32, #tpu.memory_space<vmem>>, vector<1x128xf32>
    %12 = vector.broadcast %11 : vector<1x128xf32> to vector<16x128xf32>
    %13 = arith.addf %10, %12 : vector<16x128xf32>
    %cst_11 = arith.constant dense<0xFF800000> : vector<16xf32>
    %14 = vector.multi_reduction <maximumf>, %13, %cst_11 [1] : vector<16x128xf32> to vector<16xf32>
    %15 = vector.shape_cast %14 : vector<16xf32> to vector<16x1xf32>
    %16 = vector.broadcast %15 : vector<16x1xf32> to vector<16x128xf32>
    %17 = arith.subf %13, %16 : vector<16x128xf32>
    %18 = math.exp %17 : vector<16x128xf32>
    %cst_12 = arith.constant dense<0.000000e+00> : vector<16xf32>
    %19 = vector.multi_reduction <add>, %18, %cst_12 [1] : vector<16x128xf32> to vector<16xf32>
    %20 = vector.shape_cast %19 : vector<16xf32> to vector<16x1xf32>
    %21 = math.log %20 : vector<16x1xf32>
    %22 = arith.addf %15, %21 : vector<16x1xf32>
    %23 = vector.broadcast %22 : vector<16x1xf32> to vector<16x128xf32>
    %24 = arith.subf %13, %23 : vector<16x128xf32>
    %25 = vector.extract_strided_slice %24 {offsets = [0, 0], sizes = [16, 5], strides = [1, 1]} : vector<16x128xf32> to vector<16x5xf32>
    %c0_13 = arith.constant 0 : index
    %c0_14 = arith.constant 0 : index
    %26 = vector.load %arg6[%c0_13, %c0_14] : memref<16x5xf32, #tpu.memory_space<vmem>>, vector<16x5xf32>
    tpu.vector_store %arg6[%c0_13, %c0_14], %25 {strides = array<i32>} : memref<16x5xf32, #tpu.memory_space<vmem>>, vector<16x5xf32>,
    return
  }
  func.func @transform_0(%arg0: i32) -> (i32, i32) {
    %c0_i32 = arith.constant 0 : i32
    %c0_i32_0 = arith.constant 0 : i32
    return %arg0, %c0_i32 : i32, i32
  }
  func.func @transform_1(%arg0: i32) -> (i32, i32) {
    %c0_i32 = arith.constant 0 : i32
    %c0_i32_0 = arith.constant 0 : i32
    %c0_i32_1 = arith.constant 0 : i32
    return %c0_i32, %c0_i32_0 : i32, i32
  }
  func.func @transform_2(%arg0: i32) -> (i32, i32) {
    %c0_i32 = arith.constant 0 : i32
    %c0_i32_0 = arith.constant 0 : i32
    %c0_i32_1 = arith.constant 0 : i32
    return %c0_i32, %c0_i32_0 : i32, i32
  }
  func.func @transform_3(%arg0: i32) -> (i32, i32) {
    %c0_i32 = arith.constant 0 : i32
    %c0_i32_0 = arith.constant 0 : i32
    %c0_i32_1 = arith.constant 0 : i32
    return %c0_i32, %c0_i32_0 : i32, i32
  }
  func.func @transform_4(%arg0: i32) -> (i32, i32) {
    %c0_i32 = arith.constant 0 : i32
    %c0_i32_0 = arith.constant 0 : i32
    %c0_i32_1 = arith.constant 0 : i32
    return %c0_i32, %c0_i32_0 : i32, i32
  }
  func.func @transform_5(%arg0: i32) -> (i32, i32) {
    %c0_i32 = arith.constant 0 : i32
    %c0_i32_0 = arith.constant 0 : i32
    return %arg0, %c0_i32 : i32, i32
  }
}

</mosaic_0001>

<llo_original>
// kernel: ffnn_forward.1
$region0: #{ffnn_forward.1}
  #allocation0 [shape = 'u32[]', space=smem, size = 0x4, offset = 0x4, fixed_abs, tag = 'smem constant byte address 0x4 - core index']
  #allocation1 [shape = 'u32[72,128]{1,0:T(1,128)}', space=vmem, size = 0x9000, scoped, tag = 'internal scratch']
  %s0 = inlined_call_operand.vmem [shape: bf16[16,32], index: 0, kind: input, shape index: {}]
  %s1 = inlined_call_operand.vmem [shape: bf16[32,128], index: 1, kind: input, shape index: {}]
  %s2 = inlined_call_operand.vmem [shape: f32[1,128], index: 2, kind: input, shape index: {}]
  %s3 = inlined_call_operand.hbm [shape: bf16[128,128], index: 3, kind: input, shape index: {}]
  %s4 = inlined_call_operand.vmem [shape: f32[1,128], index: 4, kind: input, shape index: {}]
  %s5 = inlined_call_operand.vmem [shape: f32[16,5], index: 5, kind: output, shape index: {}]
  %s6 = sld [smem:[#allocation0]]
  $region34: #{ffnn_forward.1} parent=0
    _
  %s8 = ssub.s32 1, %s6
  %s9 = scalar_select 0, %s8, %s6
  $region1: #{ffnn_forward.1} parent=0
    #allocation2 [shape = 'u8[32768]{0}', space=vmem, size = 0x8000, scoped, tag = 'input window, operand 3, single buffered']
    #allocation3 [shape = 's32[1]{0}', space=sflag, size = 0x4, scoped, tag = 'scoped memory for ffnn_forward.1']
    %10 = vsyncpa [#allocation3], 0
    // Predicated region
    $region2: #{ffnn_forward.1} parent=1 // pred_check
      _
    $region3: #{ffnn_forward.1} parent=1 // pred_check_branch
      %12 = sbr.rel (0) target = $region5
    $region4: #{ffnn_forward.1} parent=1 // pred_region
      _
    $region5: #{ffnn_forward.1} parent=1 // pred_fallthru
      _
    // Predicated region
    $region6: #{ffnn_forward.1} parent=1 // pred_check
      _
    $region7: #{ffnn_forward.1} parent=1 // pred_check_branch
      %14 = sbr.rel (0) target = $region9
    $region8: #{ffnn_forward.1} parent=1 // pred_region
      _
    $region9: #{ffnn_forward.1} parent=1 // pred_fallthru
      _
    // Predicated region
    $region10: #{ffnn_forward.1} parent=1 // pred_check
      _
    $region11: #{ffnn_forward.1} parent=1 // pred_check_branch
      %16 = sbr.rel (0) target = $region13
    $region12: #{ffnn_forward.1} parent=1 // pred_region
      _
    $region13: #{ffnn_forward.1} parent=1 // pred_fallthru
      _
    // Predicated region
    $region14: #{ffnn_forward.1} parent=1 // pred_check
      _
    $region15: #{ffnn_forward.1} parent=1 // pred_check_branch
      %18 = sbr.rel (0) target = $region17
    $region16: #{ffnn_forward.1} parent=1 // pred_region
      %20 = vsyncadd [#allocation3], 0
      %s21 = sshll.u32 %s3, 4
      %s22 = int_to_ptr.hbm [resolvable:$true] %s21
      %s23 = sshll.u32 [#allocation2], 4
      %s24 = int_to_ptr.vmem [resolvable:$true] %s23
      %29 = dma.hbm_to_vmem [thread:$0]  %s22, 1024, %s24, [#allocation3], 64, 64, 4
    $region17: #{ffnn_forward.1} parent=1 // pred_fallthru
      _
    // Predicated region
    $region18: #{ffnn_forward.1} parent=1 // pred_check
      _
    $region19: #{ffnn_forward.1} parent=1 // pred_check_branch
      %31 = sbr.rel (0) target = $region21
    $region20: #{ffnn_forward.1} parent=1 // pred_region
      _
    $region21: #{ffnn_forward.1} parent=1 // pred_fallthru
      _
    // Predicated region
    $region22: #{ffnn_forward.1} parent=1 // pred_check
      _
    $region23: #{ffnn_forward.1} parent=1 // pred_check_branch
      %33 = sbr.rel (0) target = $region25
    $region24: #{ffnn_forward.1} parent=1 // pred_region
      %35 = dma.done [#allocation3], 1024
    $region25: #{ffnn_forward.1} parent=1 // pred_fallthru
      _
    %v37 = vld [vmem:[%s0] sm:$0xf]
    %v38 = vld [vmem:[%s0 + $0x4] sm:$0xf]
    %v39 = vld [vmem:[%s1] sm:$0xf]
    %v40 = vld [vmem:[%s1 + $0x4] sm:$0xf]
    %v41 = vld [vmem:[%s1 + $0x8] sm:$0xf]
    %v42 = vld [vmem:[%s1 + $0xc] sm:$0xf]
    %v43 = vld [vmem:[%s2] sm:$0x1]
    %v45 = vperm.slane %v43, 0
    %v49 = vunpack.c.l.b16 %v37
    %v50 = vunpack.c.l.b16 %v38
    %v51 = vpack.c.b16 %v50, %v49
    %v56 = vunpack.c.l.b16 %v39
    %v57 = vunpack.c.l.b16 %v40
    %v58 = vunpack.c.l.b16 %v41
    %v59 = vunpack.c.l.b16 %v42
    %v60 = vpack.c.b16 %v57, %v56
    %v61 = vpack.c.b16 %v59, %v58
    %vm64 = vcmask 261120
    %v66 = vsel %vm64, %v51, 0
    %68 = vmatpush.bf16.msra.mxu0 0
    %69 = vmatpush.bf16.msra.mxu0 0
    %70 = vmatpush.bf16.msra.mxu0 0
    %71 = vmatpush.bf16.msra.mxu0 0
    %72 = vmatpush.bf16.msra.mxu0 0
    %73 = vmatpush.bf16.msra.mxu0 0
    %74 = vmatpush.bf16.msra.mxu0 %v61
    %75 = vmatpush.bf16.msra.mxu0 %v60
    %76 = vmatmul.bf16.gmra.mxu0 %v66
    %v77 = vpop.f32.mrf.mxu0
    %v78 = vadd.f32 %v45, %v77
    %v79 = vpop.f32.mrf.mxu0
    %v80 = vadd.f32 %v45, %v79
    %81 = vdwg.mxu0
    %v82 = vmax.f32 %v78, 0.0
    %v83 = vmax.f32 %v80, 0.0
    %v84 = vpack.c.bf16 %v83, %v82
    %v85 = vld [vmem:[#allocation2] sm:$0xf]
    %v86 = vld [vmem:[#allocation2 + $0x4] sm:$0xf]
    %v87 = vld [vmem:[#allocation2 + $0x8] sm:$0xf]
    %v88 = vld [vmem:[#allocation2 + $0xc] sm:$0xf]
    %v89 = vld [vmem:[#allocation2 + $0x10] sm:$0xf]
    %v90 = vld [vmem:[#allocation2 + $0x14] sm:$0xf]
    %v91 = vld [vmem:[#allocation2 + $0x18] sm:$0xf]
    %v92 = vld [vmem:[#allocation2 + $0x1c] sm:$0xf]
    %v93 = vld [vmem:[#allocation2 + $0x20] sm:$0xf]
    %v94 = vld [vmem:[#allocation2 + $0x24] sm:$0xf]
    %v95 = vld [vmem:[#allocation2 + $0x28] sm:$0xf]
    %v96 = vld [vmem:[#allocation2 + $0x2c] sm:$0xf]
    %v97 = vld [vmem:[#allocation2 + $0x30] sm:$0xf]
    %v98 = vld [vmem:[#allocation2 + $0x34] sm:$0xf]
    %v99 = vld [vmem:[#allocation2 + $0x38] sm:$0xf]
    %v100 = vld [vmem:[#allocation2 + $0x3c] sm:$0xf]
    %v101 = vld [vmem:[%s4] sm:$0x1]
    %v103 = vperm.slane %v101, 0
    %v121 = vunpack.c.l.b16 %v85
    %v122 = vunpack.c.l.b16 %v86
    %v123 = vunpack.c.l.b16 %v87
    %v124 = vunpack.c.l.b16 %v88
    %v125 = vunpack.c.l.b16 %v89
    %v126 = vunpack.c.l.b16 %v90
    %v127 = vunpack.c.l.b16 %v91
    %v128 = vunpack.c.l.b16 %v92
    %v129 = vunpack.c.l.b16 %v93
    %v130 = vunpack.c.l.b16 %v94
    %v131 = vunpack.c.l.b16 %v95
    %v132 = vunpack.c.l.b16 %v96
    %v133 = vunpack.c.l.b16 %v97
    %v134 = vunpack.c.l.b16 %v98
    %v135 = vunpack.c.l.b16 %v99
    %v136 = vunpack.c.l.b16 %v100
    %v137 = vpack.c.b16 %v122, %v121
    %v138 = vpack.c.b16 %v124, %v123
    %v139 = vpack.c.b16 %v126, %v125
    %v140 = vpack.c.b16 %v128, %v127
    %v141 = vpack.c.b16 %v130, %v129
    %v142 = vpack.c.b16 %v132, %v131
    %v143 = vpack.c.b16 %v134, %v133
    %v144 = vpack.c.b16 %v136, %v135
    %153 = vmatpush.bf16.msra.mxu0 %v144
    %154 = vmatpush.bf16.msra.mxu0 %v143
    %155 = vmatpush.bf16.msra.mxu0 %v142
    %156 = vmatpush.bf16.msra.mxu0 %v141
    %157 = vmatpush.bf16.msra.mxu0 %v140
    %158 = vmatpush.bf16.msra.mxu0 %v139
    %159 = vmatpush.bf16.msra.mxu0 %v138
    %160 = vmatpush.bf16.msra.mxu0 %v137
    %161 = vmatmul.bf16.gmra.mxu0 %v84
    %v162 = vpop.f32.mrf.mxu0
    %v163 = vadd.f32 %v103, %v162
    %v164 = vpop.f32.mrf.mxu0
    %v165 = vadd.f32 %v103, %v164
    %166 = vdwg.mxu0
    %167 = vmax.xlane.f32.xlu0 %v163
    %v168 = vpop.xlane.xlu0 %167
    %169 = vmax.xlane.f32.xlu0 %v165
    %v170 = vpop.xlane.xlu0 %169
    %v171 = vsub.f32 %v163, %v168
    %v172 = vsub.f32 %v165, %v170
    %v173 = vmul.f32 %v171, 1.442695
    %v174 = vpow.pop %v173
    %v175 = vmul.f32 %v172, 1.442695
    %v176 = vpow.pop %v175
    %177 = vadd.xlane.f32.xlu0 %v174
    %v178 = vpop.xlane.xlu0 %177
    %179 = vadd.xlane.f32.xlu0 %v176
    %v180 = vpop.xlane.xlu0 %179
    %v181 = vlog2.pop %v178
    %v182 = vmul.f32 %v181, 0.6931472
    %v183 = vlog2.pop %v180
    %v184 = vmul.f32 %v183, 0.6931472
    %v185 = vadd.f32 %v168, %v182
    %v186 = vadd.f32 %v170, %v184
    %v187 = vsub.f32 %v163, %v185
    %v188 = vsub.f32 %v165, %v186
    %vm189 = vcmask 39936
    %190 = vst.msk [vmem:[%s5] sm:$0xff] %vm189, %v187
    %191 = vst.msk [vmem:[%s5 + $0x8] sm:$0xff] %vm189, %v188
    // Predicated region
    $region26: #{ffnn_forward.1} parent=1 // pred_check
      _
    $region27: #{ffnn_forward.1} parent=1 // pred_check_branch
      %193 = sbr.rel (0) target = $region29
    $region28: #{ffnn_forward.1} parent=1 // pred_region
      _
    $region29: #{ffnn_forward.1} parent=1 // pred_fallthru
      _
    // Predicated region
    $region30: #{ffnn_forward.1} parent=1 // pred_check
      _
    $region31: #{ffnn_forward.1} parent=1 // pred_check_branch
      %195 = sbr.rel (0) target = $region33
    $region32: #{ffnn_forward.1} parent=1 // pred_region
      _
    $region33: #{ffnn_forward.1} parent=1 // pred_fallthru
      _
    %196 = vsyncpa [#allocation3], 1

</llo_original>
